<compile_context>
chip_gen: v6e
topology: v6e:2x2x1
jax: 0.10.0
libtpu: 0.0.40
codegen_flags: <defaults>
</compile_context>

<pallas_src>
import functools

import jax
import jax.numpy as jnp
from jax.experimental import pallas as pl
from jax.experimental.pallas import tpu as pltpu


def _round_up(x, m):
    return ((x + m - 1) // m) * m


def _transform_kernel(x_ref, w_ref, b_ref, g_ref, beta_ref, o_ref, *, eps):
    # x_ref: (TM, H), w_ref: (H, H) already transposed so y = x @ w + b.
    # Native-dtype operands to the MXU, f32 accumulation.
    y = jnp.dot(x_ref[...], w_ref[...], preferred_element_type=jnp.float32)
    y = y + b_ref[...].astype(jnp.float32)

    # Exact GELU (PyTorch F.gelu default, erf-based). erf lowers to the EUP slot.
    y = 0.5 * y * (1.0 + jax.lax.erf(y * jnp.float32(0.7071067811865476)))

    # LayerNorm over the last dim (population variance), eps inside the sqrt.
    mean = jnp.mean(y, axis=-1, keepdims=True)
    var = jnp.mean(jnp.square(y - mean), axis=-1, keepdims=True)
    y = (y - mean) * jax.lax.rsqrt(var + jnp.float32(eps))
    y = y * g_ref[...].astype(jnp.float32) + beta_ref[...].astype(jnp.float32)

    o_ref[...] = y.astype(o_ref.dtype)


def bert_prediction_head_transform(hidden_states, w, b, gamma, beta, *, eps, tm=512):
    """hidden_states: [B, S, H]; w: [H, H] (= W^T of nn.Linear); b/gamma/beta: [H]."""
    B, S, H = hidden_states.shape
    M = B * S
    x2d = hidden_states.reshape(M, H)
    b2d = b.reshape(1, H)
    g2d = gamma.reshape(1, H)
    beta2d = beta.reshape(1, H)

    # Row-tile size: multiple of 8 (sublane), capped at `tm`. Pad M so every block is
    # full; padded rows are sliced off at the end.
    M8 = _round_up(M, 8)
    TM = min(tm, M8)
    Mp = _round_up(M8, TM)
    if Mp != M:
        x2d = jnp.pad(x2d, ((0, Mp - M), (0, 0)))

    grid = (Mp // TM,)
    itemsize = x2d.dtype.itemsize

    # Scoped-VMEM budget derived from the real footprint:
    #   double-buffered x tile + double-buffered out tile + resident W + small vectors,
    #   plus f32 in-kernel temporaries for the (TM, H) activation. 2x safety margin,
    #   clamped to [32 MiB, 64 MiB] so it is legal on every TPU generation.
    vmem_needed = itemsize * (4 * TM * H + H * H + 3 * H) + 4 * TM * H
    vmem_limit = int(min(64 * 1024 * 1024, max(2 * vmem_needed, 32 * 1024 * 1024)))

    out = pl.pallas_call(
        functools.partial(_transform_kernel, eps=eps),
        out_shape=jax.ShapeDtypeStruct((Mp, H), hidden_states.dtype),
        grid=grid,
        in_specs=[
            pl.BlockSpec((TM, H), lambda i: (i, 0)),   # x: tiled along M
            pl.BlockSpec((H, H), lambda i: (0, 0)),    # W^T: resident across tiles
            pl.BlockSpec((1, H), lambda i: (0, 0)),    # bias: resident
            pl.BlockSpec((1, H), lambda i: (0, 0)),    # gamma: resident
            pl.BlockSpec((1, H), lambda i: (0, 0)),    # beta: resident
        ],
        out_specs=pl.BlockSpec((TM, H), lambda i: (i, 0)),
        compiler_params=pltpu.CompilerParams(
            # Row tiles are fully independent -> shard across TensorCores on v7x.
            dimension_semantics=("parallel",),
            vmem_limit_bytes=vmem_limit,
        ),
        cost_estimate=pl.CostEstimate(
            flops=2 * Mp * H * H,
            transcendentals=Mp * H,  # erf
            bytes_accessed=(2 * Mp * H + H * H + 3 * H) * itemsize,
        ),
    )(x2d, w, b2d, g2d, beta2d)

    return out[:M].reshape(B, S, H)


if __name__ == "__main__":
    # Module config: hidden_size=32, hidden_act="gelu", layer_norm_eps=1e-12
    hidden_size = 32
    eps = 1e-12
    batch, seq = 2, 8

    key = jax.random.PRNGKey(0)
    k_x, k_w, k_b, k_g, k_beta = jax.random.split(key, 5)

    x = jax.random.normal(k_x, (batch, seq, hidden_size), dtype=jnp.float32)
    # nn.Linear weight is (out, in); pass its transpose so the kernel does x @ w.
    w_linear = jax.random.normal(k_w, (hidden_size, hidden_size), dtype=jnp.float32) * 0.02
    b_linear = jax.random.normal(k_b, (hidden_size,), dtype=jnp.float32) * 0.02
    # LayerNorm params (PyTorch inits to ones/zeros; perturb to exercise them).
    gamma = 1.0 + 0.1 * jax.random.normal(k_g, (hidden_size,), dtype=jnp.float32)
    beta = 0.1 * jax.random.normal(k_beta, (hidden_size,), dtype=jnp.float32)

    out = bert_prediction_head_transform(
        x, w_linear.T, b_linear, gamma, beta, eps=eps)
    jax.block_until_ready(out)

    # Pure-JAX reference for correctness.
    y_ref = x @ w_linear.T + b_linear
    y_ref = 0.5 * y_ref * (1.0 + jax.lax.erf(y_ref / jnp.sqrt(2.0)))
    mu = jnp.mean(y_ref, axis=-1, keepdims=True)
    var = jnp.mean(jnp.square(y_ref - mu), axis=-1, keepdims=True)
    y_ref = (y_ref - mu) / jnp.sqrt(var + eps) * gamma + beta
    assert out.shape == (batch, seq, hidden_size)
    assert jnp.allclose(out, y_ref, atol=1e-5, rtol=1e-5), "mismatch vs reference"

    print("KERNEL_OK")
</pallas_src>

<mosaic_0001>
module attributes {stable_mosaic.version = 11 : i64} {
  func.func @_transform_kernel(%arg0: i32, %arg1: memref<16x32xf32, #tpu.memory_space<vmem>>, %arg2: memref<32x32xf32, #tpu.memory_space<vmem>>, %arg3: memref<1x32xf32, #tpu.memory_space<vmem>>, %arg4: memref<1x32xf32, #tpu.memory_space<vmem>>, %arg5: memref<1x32xf32, #tpu.memory_space<vmem>>, %arg6: memref<16x32xf32, #tpu.memory_space<vmem>>) attributes {dimension_semantics = [#tpu.dimension_semantics<parallel>], iteration_bounds = array<i64: 1>, scalar_prefetch = 0 : i64, scratch_operands = 0 : i64, tpu.core_type = #tpu.core_type<tc>, window_params = [{transform_indices = @transform_0, window_bounds = array<i64: 16, 32>}, {pipeline_mode = #tpu.pipeline_mode<synchronous>, transform_indices = @transform_1, window_bounds = array<i64: 32, 32>}, {pipeline_mode = #tpu.pipeline_mode<synchronous>, transform_indices = @transform_2, window_bounds = array<i64: 1, 32>}, {pipeline_mode = #tpu.pipeline_mode<synchronous>, transform_indices = @transform_3, window_bounds = array<i64: 1, 32>}, {pipeline_mode = #tpu.pipeline_mode<synchronous>, transform_indices = @transform_4, window_bounds = array<i64: 1, 32>}, {transform_indices = @transform_5, window_bounds = array<i64: 16, 32>}]} {
    %c0 = arith.constant 0 : index
    %c0_0 = arith.constant 0 : index
    %0 = vector.load %arg1[%c0, %c0_0] : memref<16x32xf32, #tpu.memory_space<vmem>>, vector<16x32xf32>
    %c0_1 = arith.constant 0 : index
    %c0_2 = arith.constant 0 : index
    %1 = vector.load %arg2[%c0_1, %c0_2] : memref<32x32xf32, #tpu.memory_space<vmem>>, vector<32x32xf32>
    %cst = arith.constant dense<0.000000e+00> : vector<16x32xf32>
    %2 = tpu.matmul %0, %1, %cst {dimension_numbers = #tpu.dot_dimension_numbers<[1], [0], [0], [1], [0, 0, 1, 1], [], []>} : vector<16x32xf32>, vector<32x32xf32>, vector<16x32xf32> -> vector<16x32xf32>
    %c0_3 = arith.constant 0 : index
    %c0_4 = arith.constant 0 : index
    %3 = vector.load %arg3[%c0_3, %c0_4] : memref<1x32xf32, #tpu.memory_space<vmem>>, vector<1x32xf32>
    %4 = vector.broadcast %3 : vector<1x32xf32> to vector<16x32xf32>
    %5 = arith.addf %2, %4 : vector<16x32xf32>
    %cst_5 = arith.constant 5.000000e-01 : f32
    %6 = vector.broadcast %cst_5 : f32 to vector<16x32xf32>
    %7 = arith.mulf %6, %5 : vector<16x32xf32>
    %cst_6 = arith.constant 0.707106769 : f32
    %8 = vector.broadcast %cst_6 : f32 to vector<16x32xf32>
    %9 = arith.mulf %5, %8 : vector<16x32xf32>
    %10 = math.erf %9 : vector<16x32xf32>
    %cst_7 = arith.constant 1.000000e+00 : f32
    %11 = vector.broadcast %cst_7 : f32 to vector<16x32xf32>
    %12 = arith.addf %11, %10 : vector<16x32xf32>
    %13 = arith.mulf %7, %12 : vector<16x32xf32>
    %cst_8 = arith.constant dense<0.000000e+00> : vector<16xf32>
    %14 = vector.multi_reduction <add>, %13, %cst_8 [1] : vector<16x32xf32> to vector<16xf32>
    %15 = vector.shape_cast %14 : vector<16xf32> to vector<16x1xf32>
    %cst_9 = arith.constant 3.200000e+01 : f32
    %16 = vector.broadcast %cst_9 : f32 to vector<16x1xf32>
    %17 = arith.divf %15, %16 : vector<16x1xf32>
    %18 = vector.broadcast %17 : vector<16x1xf32> to vector<16x32xf32>
    %19 = arith.subf %13, %18 : vector<16x32xf32>
    %20 = arith.mulf %19, %19 : vector<16x32xf32>
    %cst_10 = arith.constant dense<0.000000e+00> : vector<16xf32>
    %21 = vector.multi_reduction <add>, %20, %cst_10 [1] : vector<16x32xf32> to vector<16xf32>
    %22 = vector.shape_cast %21 : vector<16xf32> to vector<16x1xf32>
    %cst_11 = arith.constant 3.200000e+01 : f32
    %23 = vector.broadcast %cst_11 : f32 to vector<16x1xf32>
    %24 = arith.divf %22, %23 : vector<16x1xf32>
    %25 = vector.broadcast %17 : vector<16x1xf32> to vector<16x32xf32>
    %26 = arith.subf %13, %25 : vector<16x32xf32>
    %cst_12 = arith.constant 9.99999996E-13 : f32
    %27 = vector.broadcast %cst_12 : f32 to vector<16x1xf32>
    %28 = arith.addf %24, %27 : vector<16x1xf32>
    %29 = math.rsqrt %28 : vector<16x1xf32>
    %30 = vector.broadcast %29 : vector<16x1xf32> to vector<16x32xf32>
    %31 = arith.mulf %26, %30 : vector<16x32xf32>
    %c0_13 = arith.constant 0 : index
    %c0_14 = arith.constant 0 : index
    %32 = vector.load %arg4[%c0_13, %c0_14] : memref<1x32xf32, #tpu.memory_space<vmem>>, vector<1x32xf32>
    %33 = vector.broadcast %32 : vector<1x32xf32> to vector<16x32xf32>
    %34 = arith.mulf %31, %33 : vector<16x32xf32>
    %c0_15 = arith.constant 0 : index
    %c0_16 = arith.constant 0 : index
    %35 = vector.load %arg5[%c0_15, %c0_16] : memref<1x32xf32, #tpu.memory_space<vmem>>, vector<1x32xf32>
    %36 = vector.broadcast %35 : vector<1x32xf32> to vector<16x32xf32>
    %37 = arith.addf %34, %36 : vector<16x32xf32>
    %c0_17 = arith.constant 0 : index
    %c0_18 = arith.constant 0 : index
    %38 = vector.load %arg6[%c0_17, %c0_18] : memref<16x32xf32, #tpu.memory_space<vmem>>, vector<16x32xf32>
    tpu.vector_store %arg6[%c0_17, %c0_18], %37 {strides = array<i32>} : memref<16x32xf32, #tpu.memory_space<vmem>>, vector<16x32xf32>,
    return
  }
  func.func @transform_0(%arg0: i32) -> (i32, i32) {
    %c0_i32 = arith.constant 0 : i32
    %c0_i32_0 = arith.constant 0 : i32
    return %arg0, %c0_i32 : i32, i32
  }
  func.func @transform_1(%arg0: i32) -> (i32, i32) {
    %c0_i32 = arith.constant 0 : i32
    %c0_i32_0 = arith.constant 0 : i32
    %c0_i32_1 = arith.constant 0 : i32
    return %c0_i32, %c0_i32_0 : i32, i32
  }
  func.func @transform_2(%arg0: i32) -> (i32, i32) {
    %c0_i32 = arith.constant 0 : i32
    %c0_i32_0 = arith.constant 0 : i32
    %c0_i32_1 = arith.constant 0 : i32
    return %c0_i32, %c0_i32_0 : i32, i32
  }
  func.func @transform_3(%arg0: i32) -> (i32, i32) {
    %c0_i32 = arith.constant 0 : i32
    %c0_i32_0 = arith.constant 0 : i32
    %c0_i32_1 = arith.constant 0 : i32
    return %c0_i32, %c0_i32_0 : i32, i32
  }
  func.func @transform_4(%arg0: i32) -> (i32, i32) {
    %c0_i32 = arith.constant 0 : i32
    %c0_i32_0 = arith.constant 0 : i32
    %c0_i32_1 = arith.constant 0 : i32
    return %c0_i32, %c0_i32_0 : i32, i32
  }
  func.func @transform_5(%arg0: i32) -> (i32, i32) {
    %c0_i32 = arith.constant 0 : i32
    %c0_i32_0 = arith.constant 0 : i32
    return %arg0, %c0_i32 : i32, i32
  }
}

</mosaic_0001>

<llo_original>
// kernel: tpu_custom_call.1
$region0: #{tpu_custom_call.1}
  #allocation0 [shape = 'u32[]', space=smem, size = 0x4, offset = 0x4, fixed_abs, tag = 'smem constant byte address 0x4 - core index']
  #allocation1 [shape = 'u32[144,128]{1,0:T(1,128)}', space=vmem, size = 0x12000, scoped, tag = 'internal scratch']
  %s0 = inlined_call_operand.hbm [shape: f32[16,32], index: 0, kind: input, shape index: {}]
  %s1 = inlined_call_operand.hbm [shape: f32[32,32], index: 1, kind: input, shape index: {}]
  %s2 = inlined_call_operand.vmem [shape: f32[1,32], index: 2, kind: input, shape index: {}]
  %s3 = inlined_call_operand.vmem [shape: f32[1,32], index: 3, kind: input, shape index: {}]
  %s4 = inlined_call_operand.vmem [shape: f32[1,32], index: 4, kind: input, shape index: {}]
  %s5 = inlined_call_operand.hbm [shape: f32[16,32], index: 5, kind: output, shape index: {}]
  %s6 = sld [smem:[#allocation0]]
  $region38: #{tpu_custom_call.1} parent=0
    _
  %s8 = ssub.s32 1, %s6
  %s9 = scalar_select 0, %s8, %s6
  $region1: #{tpu_custom_call.1} parent=0
    #allocation2 [shape = 'u8[8192]{0}', space=vmem, size = 0x2000, scoped, tag = 'input window, operand 0, single buffered']
    #allocation3 [shape = 's32[1]{0}', space=sflag, size = 0x4, scoped, tag = 'scoped memory for tpu_custom_call.1']
    #allocation4 [shape = 's32[1]{0}', space=sflag, size = 0x4, scoped, tag = 'scoped memory for tpu_custom_call.1']
    #allocation5 [shape = 'u8[16384]{0}', space=vmem, size = 0x4000, scoped, tag = 'input window, operand 1, single buffered']
    #allocation6 [shape = 's32[1]{0}', space=sflag, size = 0x4, scoped, tag = 'scoped memory for tpu_custom_call.1']
    #allocation7 [shape = 'u8[8192]{0}', space=vmem, size = 0x2000, scoped, tag = 'output window, operand 0, single buffered']
    %10 = vsyncpa [#allocation3], 0
    %11 = vsyncpa [#allocation6], 0
    %12 = vsyncpa [#allocation4], 0
    // Predicated region
    $region2: #{tpu_custom_call.1} parent=1 // pred_check
      _
    $region3: #{tpu_custom_call.1} parent=1 // pred_check_branch
      %14 = sbr.rel (0) target = $region5
    $region4: #{tpu_custom_call.1} parent=1 // pred_region
      %s16 = ssub.s32 256, 256
      %17 = vsyncadd [#allocation3], %s16
      %s18 = sshll.u32 [#allocation2], 4
      %s19 = int_to_ptr.vmem [resolvable:$true] %s18
      %24 = dma.hbm_to_vmem [thread:$0]  %s0, 256, %s19, [#allocation3], 128, 128, 8
    $region5: #{tpu_custom_call.1} parent=1 // pred_fallthru
      _
    // Predicated region
    $region6: #{tpu_custom_call.1} parent=1 // pred_check
      _
    $region7: #{tpu_custom_call.1} parent=1 // pred_check_branch
      %26 = sbr.rel (0) target = $region9
    $region8: #{tpu_custom_call.1} parent=1 // pred_region
      %s28 = ssub.s32 512, 512
      %29 = vsyncadd [#allocation6], %s28
      %s30 = sshll.u32 [#allocation5], 4
      %s31 = int_to_ptr.vmem [resolvable:$true] %s30
      %36 = dma.hbm_to_vmem [thread:$0]  %s1, 512, %s31, [#allocation6], 128, 128, 8
    $region9: #{tpu_custom_call.1} parent=1 // pred_fallthru
      _
    // Predicated region
    $region10: #{tpu_custom_call.1} parent=1 // pred_check
      _
    $region11: #{tpu_custom_call.1} parent=1 // pred_check_branch
      %38 = sbr.rel (0) target = $region13
    $region12: #{tpu_custom_call.1} parent=1 // pred_region
      _
    $region13: #{tpu_custom_call.1} parent=1 // pred_fallthru
      _
    // Predicated region
    $region14: #{tpu_custom_call.1} parent=1 // pred_check
      _
    $region15: #{tpu_custom_call.1} parent=1 // pred_check_branch
      %40 = sbr.rel (0) target = $region17
    $region16: #{tpu_custom_call.1} parent=1 // pred_region
      _
    $region17: #{tpu_custom_call.1} parent=1 // pred_fallthru
      _
    // Predicated region
    $region18: #{tpu_custom_call.1} parent=1 // pred_check
      _
    $region19: #{tpu_custom_call.1} parent=1 // pred_check_branch
      %42 = sbr.rel (0) target = $region21
    $region20: #{tpu_custom_call.1} parent=1 // pred_region
      _
    $region21: #{tpu_custom_call.1} parent=1 // pred_fallthru
      _
    // Predicated region
    $region22: #{tpu_custom_call.1} parent=1 // pred_check
      _
    $region23: #{tpu_custom_call.1} parent=1 // pred_check_branch
      %44 = sbr.rel (0) target = $region25
    $region24: #{tpu_custom_call.1} parent=1 // pred_region
      %45 = dma.done [#allocation3], 256
    $region25: #{tpu_custom_call.1} parent=1 // pred_fallthru
      _
    // Predicated region
    $region26: #{tpu_custom_call.1} parent=1 // pred_check
      _
    $region27: #{tpu_custom_call.1} parent=1 // pred_check_branch
      %47 = sbr.rel (0) target = $region29
    $region28: #{tpu_custom_call.1} parent=1 // pred_region
      %48 = dma.done [#allocation6], 512
    $region29: #{tpu_custom_call.1} parent=1 // pred_fallthru
      _
    %v49 = vld [vmem:[#allocation2] sm:$0xff]
    %v50 = vld [vmem:[#allocation2 + $0x8] sm:$0xff]
    %v51 = vld [vmem:[#allocation5] sm:$0xff]
    %v52 = vld [vmem:[#allocation5 + $0x8] sm:$0xff]
    %v53 = vld [vmem:[#allocation5 + $0x10] sm:$0xff]
    %v54 = vld [vmem:[#allocation5 + $0x18] sm:$0xff]
    %v55 = vld [vmem:[%s2] sm:$0x1]
    %v57 = vlaneseq
    %v58 = vshrl.u32 %v57, 7
    %v59 = vsub.s32 0, %v58
    %v60 = vrot.slane %v55, %v59
    %vm62 = vcmask 261120
    %v64 = vsel %vm62, %v49, 0
    %v67 = vsel %vm62, %v50, 0
    %69 = vmatprep.subr.mxu0 0.0
    %70 = vmatpush1.msra.mxu0 0.0
    %71 = vmatprep.subr.mxu0 0.0
    %72 = vmatpush1.msra.mxu0 0.0
    %73 = vmatprep.subr.mxu0 0.0
    %74 = vmatpush1.msra.mxu0 0.0
    %75 = vmatprep.subr.mxu0 0.0
    %76 = vmatpush1.msra.mxu0 0.0
    %77 = vmatprep.subr.mxu0 0.0
    %78 = vmatpush1.msra.mxu0 0.0
    %79 = vmatprep.subr.mxu0 0.0
    %80 = vmatpush1.msra.mxu0 0.0
    %81 = vmatprep.subr.mxu0 0.0
    %82 = vmatpush1.msra.mxu0 0.0
    %83 = vmatprep.subr.mxu0 0.0
    %84 = vmatpush1.msra.mxu0 0.0
    %85 = vmatprep.subr.mxu0 0.0
    %86 = vmatpush1.msra.mxu0 0.0
    %87 = vmatprep.subr.mxu0 0.0
    %88 = vmatpush1.msra.mxu0 0.0
    %89 = vmatprep.subr.mxu0 0.0
    %90 = vmatpush1.msra.mxu0 0.0
    %91 = vmatprep.subr.mxu0 0.0
    %92 = vmatpush1.msra.mxu0 0.0
    %93 = vmatprep.subr.mxu0 0.0
    %94 = vmatpush1.msra.mxu0 %v54
    %95 = vmatprep.subr.mxu0 0.0
    %96 = vmatpush1.msra.mxu0 %v53
    %97 = vmatprep.subr.mxu0 0.0
    %98 = vmatpush1.msra.mxu0 %v52
    %99 = vmatprep.subr.mxu0 0.0
    %100 = vmatpush1.msra.mxu0 %v51
    %101 = vmatprep.subr.mxu0 0.0
    %102 = vmatpush2.msra.mxu0 0.0
    %103 = vmatprep.subr.mxu0 0.0
    %104 = vmatpush2.msra.mxu0 0.0
    %105 = vmatprep.subr.mxu0 0.0
    %106 = vmatpush2.msra.mxu0 0.0
    %107 = vmatprep.subr.mxu0 0.0
    %108 = vmatpush2.msra.mxu0 0.0
    %109 = vmatprep.subr.mxu0 0.0
    %110 = vmatpush2.msra.mxu0 0.0
    %111 = vmatprep.subr.mxu0 0.0
    %112 = vmatpush2.msra.mxu0 0.0
    %113 = vmatprep.subr.mxu0 0.0
    %114 = vmatpush2.msra.mxu0 0.0
    %115 = vmatprep.subr.mxu0 0.0
    %116 = vmatpush2.msra.mxu0 0.0
    %117 = vmatprep.subr.mxu0 0.0
    %118 = vmatpush2.msra.mxu0 0.0
    %119 = vmatprep.subr.mxu0 0.0
    %120 = vmatpush2.msra.mxu0 0.0
    %121 = vmatprep.subr.mxu0 0.0
    %122 = vmatpush2.msra.mxu0 0.0
    %123 = vmatprep.subr.mxu0 0.0
    %124 = vmatpush2.msra.mxu0 0.0
    %125 = vmatprep.subr.mxu0 0.0
    %126 = vmatpush2.msra.mxu0 0.0
    %127 = vmatprep.subr.mxu0 0.0
    %128 = vmatpush2.msra.mxu0 0.0
    %129 = vmatprep.subr.mxu0 0.0
    %130 = vmatpush2.msra.mxu0 0.0
    %131 = vmatprep.subr.mxu0 0.0
    %132 = vmatpush2.msra.mxu0 0.0
    %133 = vmatprep.mubr.f32.mxu0 0.0
    %134 = vmatmul.mubr.f32.gmra.mxu0 %v64
    %v135 = vpop.f32.mrf.mxu0
    %v136 = vadd.f32 %v60, %v135
    %v137 = vpop.f32.mrf.mxu0
    %138 = vmatprep.mubr.f32.mxu0 0.0
    %139 = vmatmul.mubr.f32.gmra.mxu0 %v67
    %v140 = vpop.f32.mrf.mxu0
    %v141 = vadd.f32 %v60, %v140
    %v142 = vpop.f32.mrf.mxu0
    %143 = vdwg.mxu0
    %v144 = vmul.f32 %v136, 0.5
    %v145 = vmul.f32 %v141, 0.5
    %v146 = vmul.f32 %v136, 0.70710677
    %v147 = vmul.f32 %v141, 0.70710677
    %v148 = verf.f32.pop %v146
    %v149 = verf.f32.pop %v147
    %v150 = vadd.f32 %v148, 1.0
    %v151 = vadd.f32 %v149, 1.0
    %v152 = vmul.f32 %v144, %v150
    %v153 = vmul.f32 %v145, %v151
    %v154 = vsel %vm62, %v152, 0.0
    %155 = vadd.xlane.f32.xlu0 %v154
    %v156 = vpop.xlane.xlu0 %155
    %v157 = vsel %vm62, %v153, 0.0
    %158 = vadd.xlane.f32.xlu0 %v157
    %v159 = vpop.xlane.xlu0 %158
    %v160 = vrcp.pop 32.0
    %v161 = vmul.f32 %v156, %v160
    %v162 = vmul.f32 %v159, %v160
    %v163 = vsub.f32 %v152, %v161
    %v164 = vsub.f32 %v153, %v162
    %v165 = vmul.f32 %v163, %v163
    %v166 = vmul.f32 %v164, %v164
    %v167 = vsel %vm62, %v165, 0.0
    %168 = vadd.xlane.f32.xlu0 %v167
    %v169 = vpop.xlane.xlu0 %168
    %v170 = vsel %vm62, %v166, 0.0
    %171 = vadd.xlane.f32.xlu0 %v170
    %v172 = vpop.xlane.xlu0 %171
    %v173 = vmul.f32 %v169, %v160
    %v174 = vmul.f32 %v172, %v160
    %v175 = vadd.f32 %v173, 1e-12
    %v176 = vadd.f32 %v174, 1e-12
    %v177 = vrsqrt.pop %v175
    %v178 = vrsqrt.pop %v176
    %v179 = vmul.f32 %v163, %v177
    %v180 = vmul.f32 %v164, %v178
    %v181 = vld [vmem:[%s3] sm:$0x1]
    %v183 = vlaneseq
    %v184 = vshrl.u32 %v183, 7
    %v185 = vsub.s32 0, %v184
    %v186 = vrot.slane %v181, %v185
    %v188 = vmul.f32 %v179, %v186
    %v189 = vmul.f32 %v180, %v186
    %v190 = vld [vmem:[%s4] sm:$0x1]
    %v192 = vlaneseq
    %v193 = vshrl.u32 %v192, 7
    %v194 = vsub.s32 0, %v193
    %v195 = vrot.slane %v190, %v194
    %v197 = vadd.f32 %v188, %v195
    %v198 = vadd.f32 %v189, %v195
    %199 = vst.msk [vmem:[#allocation7] sm:$0xff] %vm62, %v197
    %200 = vst.msk [vmem:[#allocation7 + $0x8] sm:$0xff] %vm62, %v198
    // Predicated region
    $region30: #{tpu_custom_call.1} parent=1 // pred_check
      _
    $region31: #{tpu_custom_call.1} parent=1 // pred_check_branch
      %202 = sbr.rel (0) target = $region33
    $region32: #{tpu_custom_call.1} parent=1 // pred_region
      %s204 = ssub.s32 256, 256
      %205 = vsyncadd [#allocation4], %s204
      %s206 = sshll.u32 [#allocation7], 4
      %s207 = int_to_ptr.vmem [resolvable:$true] %s206
      %212 = dma.vmem_to_hbm [thread:$0]  %s207, 256, %s5, [#allocation4], 128, 128, 8
    $region33: #{tpu_custom_call.1} parent=1 // pred_fallthru
      _
    // Predicated region
    $region34: #{tpu_custom_call.1} parent=1 // pred_check
      _
    $region35: #{tpu_custom_call.1} parent=1 // pred_check_branch
      %214 = sbr.rel (0) target = $region37
    $region36: #{tpu_custom_call.1} parent=1 // pred_region
      %215 = dma.done [#allocation4], 256
    $region37: #{tpu_custom_call.1} parent=1 // pred_fallthru
      _
    %216 = vsyncpa [#allocation3], 1
    %217 = vsyncpa [#allocation6], 1
    %218 = vsyncpa [#allocation4], 1

</llo_original>
